<compile_context>
chip_gen: v7x
topology: tpu7x:2x2x1
jax: 0.10.0
libtpu: 0.0.40
codegen_flags: <defaults>
</compile_context>

<pallas_src>
import math

import jax
import jax.numpy as jnp
from jax.experimental import pallas as pl
from jax.experimental.pallas import tpu as pltpu


def make_pe_table(d_model: int, max_seq_len: int, dtype=jnp.float32) -> jnp.ndarray:
    """Sinusoidal positional-encoding table, shape (max_seq_len, d_model)."""
    position = jnp.arange(max_seq_len, dtype=jnp.float32)[:, None]           # (L, 1)
    div_term = jnp.exp(
        jnp.arange(0, d_model, 2, dtype=jnp.float32) * (-math.log(10000.0) / d_model)
    )                                                                         # (ceil(D/2),)
    angles = position * div_term                                              # (L, ceil(D/2))
    pe = jnp.zeros((max_seq_len, d_model), dtype=jnp.float32)
    pe = pe.at[:, 0::2].set(jnp.sin(angles))
    pe = pe.at[:, 1::2].set(jnp.cos(angles[:, : d_model // 2]))               # safe for odd D too
    return pe.astype(dtype)


def _sublane_multiple(dtype) -> int:
    # Sub-32-bit dtypes pack rows along sublanes; keep tiles on packed-row
    # boundaries so stores stay unmasked and no relayout happens at tile edges.
    itemsize = jnp.dtype(dtype).itemsize
    if itemsize >= 4:
        return 8
    if itemsize == 2:
        return 16
    return 32


def _generation_block_config():
    """(target_block_bytes, vmem_limit_bytes or None) chosen per TPU generation."""
    try:
        kind = jax.devices()[0].device_kind.lower()
    except Exception:  # pragma: no cover - defensive; fall back to conservative
        kind = ""
    if any(tag in kind for tag in ("v6", "v7", "tpu7")):
        # v6e (1.4 TB/s) / v7x (3.2 TB/s): bigger blocks amortize the ~0.35 us
        # per-grid-step overhead. Steady-state live set after the grid reorder
        # is ~2 arrays x 2 buffers x block + pe, so 4 MiB blocks need <~24 MiB;
        # raise the scoped limit explicitly (48 MiB still fits v7x's 64 MiB
        # physical VMEM with headroom).
        return 4 * 1024 * 1024, 48 * 1024 * 1024
    # v5e / older / unknown: ~2 MiB blocks already stream in >> step overhead
    # at ~820 GB/s, and 6 x 2 MiB stays under the 16 MiB scoped-VMEM default.
    return 2 * 1024 * 1024, None


def _add_pe_kernel_3d(x_ref, pe_ref, o_ref):
    # x_ref / o_ref: (TS, D)   (leading batch dim squeezed away)
    # pe_ref:        (TS, D)   windowed out of the (rows, D) table
    o_ref[...] = x_ref[...] + pe_ref[...]


def _add_pe_kernel_2d(x_ref, pe_ref, o_ref):
    # Lane-dense flattened path.
    # x_ref / o_ref: (TB, TL)
    # pe_ref:        (1, TL)   broadcast over batch by the add
    o_ref[...] = x_ref[...] + pe_ref[...]


def positional_encoding_forward(x: jnp.ndarray, pe: jnp.ndarray) -> jnp.ndarray:
    """x: (B, S, D); pe: (max_seq_len, D). Returns x + pe[None, :S, :]."""
    B, S, D = x.shape
    max_seq_len = pe.shape[0]
    if S > max_seq_len:
        raise ValueError(f"sequence length {S} exceeds max_seq_len {max_seq_len}")

    # The table is normally built in the right dtype (make_pe_table(dtype=...)),
    # so this is a no-op. If it does mismatch, cast only the S rows we need
    # instead of the full max_seq_len table.
    # TODO(synk): the PyTorch module keeps pe in fp32 and lets the add promote;
    # here the add runs in x.dtype (intentional bandwidth trade-off).
    if pe.dtype != x.dtype:
        pe = pe[:S].astype(x.dtype)

    itemsize = jnp.dtype(x.dtype).itemsize
    sub = _sublane_multiple(x.dtype)
    target_block_bytes, vmem_limit = _generation_block_config()

    if D % 128 == 0 and S >= sub:
        # ---- Path A: 3-D, tile the sequence axis, window into the pe table.
        ts = max(sub, (target_block_bytes // (D * itemsize)) // sub * sub)
        ts = min(ts, (S // sub) * sub)  # multiple of sub, <= S; cdiv grid masks the tail
        # Grid order (s_tiles, B): batch is the innermost axis, so the pe block
        # index (a function of s only) is constant across the inner loop and
        # the (ts, D) pe tile is DMA'd once per s-tile, not once per (b, s).
        grid = (pl.cdiv(S, ts), B)

        # Tail blocks (ts not dividing S) rely on Pallas partial-block handling:
        # out-of-range rows are clamped/masked on both the pe read and the
        # output store, so they never affect the result.
        return pl.pallas_call(
            _add_pe_kernel_3d,
            out_shape=jax.ShapeDtypeStruct((B, S, D), x.dtype),
            grid_spec=pltpu.PrefetchScalarGridSpec(
                num_scalar_prefetch=0,
                grid=grid,
                in_specs=[
                    pl.BlockSpec((pl.Squeezed(), ts, D), lambda s, b: (b, s, 0)),
                    # Same row window of the pe table for every batch index.
                    pl.BlockSpec((ts, D), lambda s, b: (s, 0)),
                ],
                out_specs=pl.BlockSpec((pl.Squeezed(), ts, D), lambda s, b: (b, s, 0)),
            ),
            compiler_params=pltpu.CompilerParams(
                # Both axes parallel so v7x's two TensorCores split the grid.
                dimension_semantics=("parallel", "parallel"),
                vmem_limit_bytes=vmem_limit,
            ),
        )(x, pe)

    # ---- Path B: lane-dense flattened add (covers D not a multiple of 128 and
    # tiny S). The reshape is wrapper-side layout plumbing; pe broadcasts only
    # over batch, so flattening (S, D) -> (S*D,) preserves the semantics.
    L = S * D
    x2 = x.reshape(B, L)
    pe2 = pe[:S, :].reshape(1, L)

    # Size tiles against the sublane-PADDED shapes: a (tb, tl) block lives in
    # VMEM as (round_up(tb, sub), tl) and the (1, tl) pe block as (sub, tl).
    max_tb = max(sub, (target_block_bytes // (512 * itemsize)) // sub * sub)
    tb = B if B <= max_tb else max_tb               # full dim or a multiple of sub
    tb_pad = -(-tb // sub) * sub
    tl = max(128, (target_block_bytes // ((tb_pad + sub) * itemsize)) // 128 * 128)
    if tl >= L:
        tl = L                                       # full flat axis in one block
    grid = (pl.cdiv(L, tl), pl.cdiv(B, tb))          # batch inner: pe tile fetched once per l-tile

    out2 = pl.pallas_call(
        _add_pe_kernel_2d,
        out_shape=jax.ShapeDtypeStruct((B, L), x.dtype),
        grid_spec=pltpu.PrefetchScalarGridSpec(
            num_scalar_prefetch=0,
            grid=grid,
            in_specs=[
                pl.BlockSpec((tb, tl), lambda l, b: (b, l)),
                pl.BlockSpec((1, tl), lambda l, b: (0, l)),
            ],
            out_specs=pl.BlockSpec((tb, tl), lambda l, b: (b, l)),
        ),
        compiler_params=pltpu.CompilerParams(
            dimension_semantics=("parallel", "parallel"),
            vmem_limit_bytes=vmem_limit,
        ),
    )(x2, pe2)
    return out2.reshape(B, S, D)


if __name__ == "__main__":
    key = jax.random.PRNGKey(0)

    # Demo shapes consistent with the module: batch=2, seq=8, d_model=32.
    d_model, max_seq_len = 32, 64
    B, S = 2, 8
    x = jax.random.normal(key, (B, S, d_model), dtype=jnp.float32)
    pe = make_pe_table(d_model, max_seq_len, dtype=x.dtype)

    out = positional_encoding_forward(x, pe)
    out = jax.block_until_ready(out)
    ref = x + pe[None, :S, :].astype(jnp.float32)
    assert out.shape == (B, S, d_model)
    assert jnp.allclose(out, ref, atol=1e-6), "mismatch vs reference (flattened path)"

    # Exercise the lane-aligned 3-D path as well (D multiple of 128, S >= 8).
    d_model2, S2 = 128, 16
    x2 = jax.random.normal(jax.random.PRNGKey(1), (B, S2, d_model2), dtype=jnp.float32)
    pe_2 = make_pe_table(d_model2, max_seq_len, dtype=x2.dtype)
    out2 = jax.block_until_ready(positional_encoding_forward(x2, pe_2))
    ref2 = x2 + pe_2[None, :S2, :].astype(jnp.float32)
    assert jnp.allclose(out2, ref2, atol=1e-6), "mismatch vs reference (3-D path)"

    print("KERNEL_OK")
</pallas_src>

<mosaic_0001>
module attributes {stable_mosaic.version = 11 : i64} {
  func.func @_add_pe_kernel_2d(%arg0: i32, %arg1: i32, %arg2: memref<2x256xf32, #tpu.memory_space<vmem>>, %arg3: memref<1x256xf32, #tpu.memory_space<vmem>>, %arg4: memref<2x256xf32, #tpu.memory_space<vmem>>) attributes {dimension_semantics = [#tpu.dimension_semantics<parallel>, #tpu.dimension_semantics<parallel>], iteration_bounds = array<i64: 1, 1>, scalar_prefetch = 0 : i64, scratch_operands = 0 : i64, tpu.core_type = #tpu.core_type<tc>, window_params = [{transform_indices = @transform_0, window_bounds = array<i64: 2, 256>}, {transform_indices = @transform_1, window_bounds = array<i64: 1, 256>}, {transform_indices = @transform_2, window_bounds = array<i64: 2, 256>}]} {
    %c0 = arith.constant 0 : index
    %c0_0 = arith.constant 0 : index
    %0 = vector.load %arg2[%c0, %c0_0] : memref<2x256xf32, #tpu.memory_space<vmem>>, vector<2x256xf32>
    %c0_1 = arith.constant 0 : index
    %c0_2 = arith.constant 0 : index
    %1 = vector.load %arg3[%c0_1, %c0_2] : memref<1x256xf32, #tpu.memory_space<vmem>>, vector<1x256xf32>
    %2 = vector.broadcast %1 : vector<1x256xf32> to vector<2x256xf32>
    %3 = arith.addf %0, %2 : vector<2x256xf32>
    %c0_3 = arith.constant 0 : index
    %c0_4 = arith.constant 0 : index
    %4 = vector.load %arg4[%c0_3, %c0_4] : memref<2x256xf32, #tpu.memory_space<vmem>>, vector<2x256xf32>
    tpu.vector_store %arg4[%c0_3, %c0_4], %3 {strides = array<i32>} : memref<2x256xf32, #tpu.memory_space<vmem>>, vector<2x256xf32>,
    return
  }
  func.func @transform_0(%arg0: i32, %arg1: i32) -> (i32, i32) {
    %c0_i32 = arith.constant 0 : i32
    return %arg1, %arg0 : i32, i32
  }
  func.func @transform_1(%arg0: i32, %arg1: i32) -> (i32, i32) {
    %c0_i32 = arith.constant 0 : i32
    %c0_i32_0 = arith.constant 0 : i32
    return %c0_i32, %arg0 : i32, i32
  }
  func.func @transform_2(%arg0: i32, %arg1: i32) -> (i32, i32) {
    %c0_i32 = arith.constant 0 : i32
    return %arg1, %arg0 : i32, i32
  }
}

</mosaic_0001>

<llo_original>
// kernel: tpu_custom_call.1
$region0: #{tpu_custom_call.1}
  #allocation0 [shape = 'u32[]', space=smem, size = 0x4, offset = 0x4, fixed_abs, tag = 'smem constant byte address 0x4 - core index']
  #allocation1 [shape = 'u32[144,128]{1,0:T(1,128)}', space=vmem, size = 0x12000, scoped, tag = 'internal scratch']
  %s0 = inlined_call_operand.hbm [shape: f32[2,256], index: 0, kind: input, shape index: {}]
  %s1 = inlined_call_operand.vmem [shape: f32[1,256], index: 1, kind: input, shape index: {}]
  %s2 = inlined_call_operand.hbm [shape: f32[2,256], index: 2, kind: output, shape index: {}]
  %s3 = sld [smem:[#allocation0]]
  $region22: #{tpu_custom_call.1} parent=0
    _
  %s5 = ssub.s32 1, %s3
  %s6 = scalar_select 0, %s5, %s3
  $region1: #{tpu_custom_call.1} parent=0
    #allocation2 [shape = 'u8[2048]{0}', space=vmem, size = 0x800, scoped, tag = 'input window, operand 0, single buffered']
    #allocation3 [shape = 's32[1]{0}', space=sflag, size = 0x4, scoped, tag = 'scoped memory for tpu_custom_call.1']
    #allocation4 [shape = 's32[1]{0}', space=sflag, size = 0x4, scoped, tag = 'scoped memory for tpu_custom_call.1']
    #allocation5 [shape = 'u8[2048]{0}', space=vmem, size = 0x800, scoped, tag = 'output window, operand 0, single buffered']
    %7 = vsyncpa [#allocation3], 0
    %8 = vsyncpa [#allocation4], 0
    // Predicated region
    $region2: #{tpu_custom_call.1} parent=1 // pred_check
      _
    $region3: #{tpu_custom_call.1} parent=1 // pred_check_branch
      %10 = sbr.rel (0) target = $region5
    $region4: #{tpu_custom_call.1} parent=1 // pred_region
      %s12 = ssub.s32 64, 64
      %13 = vsyncadd [#allocation3], %s12
      %s15 = sshll.u32 [#allocation2], 4
      %s16 = int_to_ptr.vmem [resolvable:$true] %s15
      %18 = dma.hbm_to_vmem [thread:$0]  %s0, 64, %s16, [#allocation3]
    $region5: #{tpu_custom_call.1} parent=1 // pred_fallthru
      _
    // Predicated region
    $region6: #{tpu_custom_call.1} parent=1 // pred_check
      _
    $region7: #{tpu_custom_call.1} parent=1 // pred_check_branch
      %20 = sbr.rel (0) target = $region9
    $region8: #{tpu_custom_call.1} parent=1 // pred_region
      _
    $region9: #{tpu_custom_call.1} parent=1 // pred_fallthru
      _
    // Predicated region
    $region10: #{tpu_custom_call.1} parent=1 // pred_check
      _
    $region11: #{tpu_custom_call.1} parent=1 // pred_check_branch
      %22 = sbr.rel (0) target = $region13
    $region12: #{tpu_custom_call.1} parent=1 // pred_region
      %23 = dma.done [#allocation3], 64
    $region13: #{tpu_custom_call.1} parent=1 // pred_fallthru
      _
    %v24 = vld [vmem:[#allocation2] sm:$0xf]
    %v25 = vld [vmem:[%s1] sm:$0x3]
    %v27 = vlaneseq
    %v28 = vshrl.u32 %v27, 7
    %v29 = vsub.s32 0, %v28
    %v30 = vrot.slane %v25, %v29
    %v31 = vlaneseq
    %v32 = vshrl.u32 %v31, 7
    %v33 = vsub.s32 1, %v32
    %v34 = vrot.slane %v25, %v33
    %v35 = vcombine.low %v30, %v34
    %v37 = vunpack.c.l.s4 1983009808
    %v38 = vunpack.c.0.s8 %v37
    %v39 = vlaneseq
    %v40 = vshrl.u32 %v39, 7
    %v41 = vsub.s32 %v38, %v40
    %v42 = vrot.slane %v35, %v41
    %v44 = vadd.f32 %v24, %v42
    %45 = vst [vmem:[#allocation5] sm:$0xf] %v44
    // Predicated region
    $region14: #{tpu_custom_call.1} parent=1 // pred_check
      _
    $region15: #{tpu_custom_call.1} parent=1 // pred_check_branch
      %47 = sbr.rel (0) target = $region17
    $region16: #{tpu_custom_call.1} parent=1 // pred_region
      %s49 = ssub.s32 64, 64
      %50 = vsyncadd [#allocation4], %s49
      %s52 = sshll.u32 [#allocation5], 4
      %s53 = int_to_ptr.vmem [resolvable:$true] %s52
      %55 = dma.vmem_to_hbm [thread:$0]  %s53, 64, %s2, [#allocation4]
    $region17: #{tpu_custom_call.1} parent=1 // pred_fallthru
      _
    // Predicated region
    $region18: #{tpu_custom_call.1} parent=1 // pred_check
      _
    $region19: #{tpu_custom_call.1} parent=1 // pred_check_branch
      %57 = sbr.rel (0) target = $region21
    $region20: #{tpu_custom_call.1} parent=1 // pred_region
      %58 = dma.done [#allocation4], 64
    $region21: #{tpu_custom_call.1} parent=1 // pred_fallthru
      _
    %59 = vsyncpa [#allocation3], 1
    %60 = vsyncpa [#allocation4], 1

</llo_original>
